<compile_context>
chip_gen: v5e
topology: v5e:2x2
jax: 0.10.0
libtpu: 0.0.40
codegen_flags: <defaults>
</compile_context>

<pallas_src>
import functools

import jax
import jax.numpy as jnp
from jax import lax
from jax.experimental import pallas as pl
from jax.experimental.pallas import tpu as pltpu


# ----------------------------- kernel ----------------------------------------

def _fagcn_kernel(mxu_bf16,
                  x_ref, t1w_ref, t1b_ref, gwd_ref, gws_ref, cs_ref,
                  t2w_ref, t2b_ref, scal_ref,
                  o_ref,
                  h_ref, hnew_ref, raw_ref, gu_ref):
    # scal (SMEM, f32[1+3L]) = [eps, (gate_b_i, tanh(yes_i), tanh(no_i)) * L]
    l = pl.program_id(0)                 # layer index   (outer, 'arbitrary')
    t = pl.program_id(1)                 # dst row tile  (inner, 'arbitrary')
    nl = pl.num_programs(0)
    nt = pl.num_programs(1)
    tm = cs_ref.shape[0]                 # rows per tile (static)

    # ---- one-time prologue: h = relu(x @ t1_w + t1_b); raw = h --------------
    @pl.when(jnp.logical_and(l == 0, t == 0))
    def _():
        h0 = jnp.dot(x_ref[...], t1w_ref[...], preferred_element_type=jnp.float32)
        h0 = jnp.maximum(h0 + t1b_ref[...], 0.0)
        h_ref[...] = h0
        raw_ref[...] = h0

    # ---- per-layer prologue (first tile): src-gate values for ALL nodes -----
    # (8,H) @ (N,H)^T -> (8,N)  (flash-attention style contraction: no h
    # transpose; result lands directly in lane layout).  Row 0 = h[u].w_src.
    @pl.when(t == 0)
    def _():
        gu_ref[...] = lax.dot_general(
            gws_ref[l], h_ref[...], (((1,), (1,)), ((), ())),
            preferred_element_type=jnp.float32)

    # ---- per-tile edge work on TM destination rows ---------------------------
    eps = scal_ref[0]
    gate_b = scal_ref[1 + 3 * l]
    t_yes = scal_ref[2 + 3 * l]          # tanh(yes_w), precomputed (yn is binary)
    t_no = scal_ref[3 + 3 * l]           # tanh(no_w)

    row0 = pl.multiple_of(t * tm, tm)
    h_full = h_ref[...]                                  # (N, H) prev-layer h
    h_tile = h_ref[pl.ds(row0, tm), :]                   # (TM, H) dst rows

    # dst-gate values: VPU multiply + lane reduce (no n=1 MXU matmul).
    gv = jnp.sum(h_tile * gwd_ref[l], axis=1, keepdims=True)        # (TM, 1)
    # gate([h_dst, h_src]) via broadcast-add outer sum, one EUP tanh per edge.
    g = jnp.tanh(gv + gu_ref[0:1, :] + gate_b)                      # (TM, N)

    cs = cs_ref[...]                     # sign(yn) packed into c = .5*d*d^T*adj
    c_abs = jnp.abs(cs)
    yn_t = jnp.where(cs > 0, t_yes, t_no)        # tanh blend; yn is exactly {0,1}
    e = (g + yn_t) * c_abs                                           # (TM, N)

    # The only O(N^2*H) matmul: bf16 operands, f32 accumulation (MXU native).
    mxu_dt = jnp.bfloat16 if mxu_bf16 else jnp.float32
    agg = jnp.dot(e.astype(mxu_dt), h_full.astype(mxu_dt),
                  preferred_element_type=jnp.float32)                # (TM, H)
    hnew_ref[pl.ds(row0, tm), :] = eps * raw_ref[pl.ds(row0, tm), :] + agg

    # ---- end of layer: publish the new h for the next layer ------------------
    @pl.when(t == nt - 1)
    def _():
        h_ref[...] = hnew_ref[...]

    # ---- final epilogue: t2 + masked log_softmax, lane-padded output ---------
    @pl.when(jnp.logical_and(l == nl - 1, t == nt - 1))
    def _():
        y = jnp.dot(hnew_ref[...], t2w_ref[...],
                    preferred_element_type=jnp.float32) + t2b_ref[...]
        m = jnp.max(y, axis=1, keepdims=True)        # pad cols carry -1e30 bias
        s = y - m
        lse = jnp.log(jnp.sum(jnp.exp(s), axis=1, keepdims=True))
        o_ref[...] = s - lse


# ----------------------------- wrapper ----------------------------------------

def _pick_row_tile(n):
    # Biggest tile that keeps the double-buffered (TM, N) stream comfortable.
    if n <= 512:
        return n
    for tm in (512, 256, 128, 64, 32, 16, 8):
        if n % tm == 0:
            return tm
    return n  # TODO(synk): ragged last tile via masking


def fagcn_forward(x, params, adj, yn, d, eps, layer_num, *, mxu_bf16=True):
    assert layer_num >= 1
    n, in_dim = x.shape
    hdim = params["t1_w"].shape[1]
    out_dim = params["t2_w"].shape[1]
    out_pad = ((out_dim + 127) // 128) * 128
    f32 = jnp.float32

    # Layer-invariant edge constant with the binary edge attribute packed into
    # its sign bit (valid because c >= 0: d >= 0, adj in {0,1}).  One f32 N^2
    # stream per layer (4 B/edge) instead of separate c and yn (8 B/edge).
    c = (0.5 * d * d.T * adj).astype(f32)
    cs = jnp.where(yn > 0.5, c, -c).astype(f32)

    # Gate weights, stacked per layer:
    #   dst part (L, 1, H)  -> in-kernel lane reduce
    #   src part (L, 8, H)  -> sublane-aligned LHS of the A @ B^T contraction
    w_dst = jnp.stack([gw[:, 0].reshape(1, hdim) for gw in params["gate_w"]]).astype(f32)
    w_src = jnp.stack([jnp.tile(gw[:, 1].reshape(1, hdim), (8, 1))
                       for gw in params["gate_w"]]).astype(f32)

    # Lane-dense (multiple-of-128) output: pad t2; padded logits get a -1e30
    # bias so the in-kernel log_softmax ignores them; slice off outside.
    t2w_p = jnp.zeros((hdim, out_pad), f32).at[:, :out_dim].set(
        params["t2_w"].astype(f32))
    t2b_p = jnp.full((1, out_pad), -1e30, f32).at[:, :out_dim].set(
        params["t2_b"].reshape(1, out_dim).astype(f32))

    # Per-layer scalars in SMEM: [eps, (gate_b, tanh(yes), tanh(no)) * L]
    scal = [jnp.asarray(eps, f32)]
    for i in range(layer_num):
        scal += [jnp.asarray(params["gate_b"][i], f32),
                 jnp.tanh(jnp.asarray(params["yes_w"][i], f32)),
                 jnp.tanh(jnp.asarray(params["no_w"][i], f32))]
    scal = jnp.stack(scal)

    tm = _pick_row_tile(n)
    grid = (layer_num, n // tm)

    # Scoped-VMEM budget: residents + double-buffered (TM, N) stream, clamped to
    # 64 MiB (valid on v7x; v5e/v6e could go higher for bigger tiles).
    resident = 4 * (3 * n * hdim + 8 * n + n * in_dim + in_dim * hdim
                    + hdim * out_pad + out_pad + n * out_pad
                    + layer_num * 9 * hdim)
    streamed = 4 * 2 * tm * n
    vmem_limit = int(min(max(2 * (resident + streamed), 32 * 1024 * 1024),
                         64 * 1024 * 1024))

    const2 = lambda i, j: (0, 0)
    const3 = lambda i, j: (0, 0, 0)

    kernel = functools.partial(_fagcn_kernel, mxu_bf16)
    out = pl.pallas_call(
        kernel,
        grid=grid,
        in_specs=[
            pl.BlockSpec((n, in_dim), const2),                 # x
            pl.BlockSpec((in_dim, hdim), const2),              # t1_w
            pl.BlockSpec((1, hdim), const2),                   # t1_b
            pl.BlockSpec((layer_num, 1, hdim), const3),        # gate dst weights
            pl.BlockSpec((layer_num, 8, hdim), const3),        # gate src weights
            pl.BlockSpec((tm, n), lambda i, j: (j, 0)),        # signed edge consts
            pl.BlockSpec((hdim, out_pad), const2),             # t2_w (padded)
            pl.BlockSpec((1, out_pad), const2),                # t2_b (padded)
            pl.BlockSpec(memory_space=pltpu.MemorySpace.SMEM),  # per-layer scalars
        ],
        out_specs=pl.BlockSpec((n, out_pad), const2),
        out_shape=jax.ShapeDtypeStruct((n, out_pad), f32),
        scratch_shapes=[
            pltpu.VMEM((n, hdim), f32),    # h     (previous-layer features)
            pltpu.VMEM((n, hdim), f32),    # h_new (current-layer features)
            pltpu.VMEM((n, hdim), f32),    # raw   (t1 output, reused every layer)
            pltpu.VMEM((8, n), f32),       # per-layer src-gate row (lane layout)
        ],
        compiler_params=pltpu.CompilerParams(
            dimension_semantics=("arbitrary", "arbitrary"),
            vmem_limit_bytes=vmem_limit),
    )(x.astype(f32), params["t1_w"].astype(f32),
      params["t1_b"].reshape(1, hdim).astype(f32),
      w_dst, w_src, cs, t2w_p, t2b_p, scal)
    return out[:, :out_dim]


# ----------------------------- reference --------------------------------------

def fagcn_reference(x, params, adj, yn, d, eps, layer_num):
    hp = lax.Precision.HIGHEST
    h = jnp.maximum(jnp.dot(x, params["t1_w"], precision=hp) + params["t1_b"], 0.0)
    raw = h
    for i in range(layer_num):
        gw2 = params["gate_w"][i]                 # (H, 2): col0 = dst, col1 = src
        gv = jnp.dot(h, gw2[:, 0:1], precision=hp)
        gu = jnp.dot(h, gw2[:, 1:2], precision=hp)
        g = jnp.tanh(gv + gu.T + params["gate_b"][i])
        yn_t = jnp.tanh(yn * params["yes_w"][i] + (1.0 - yn) * params["no_w"][i])
        e = (g + yn_t) * 0.5 * d * d.T * adj
        h = eps * raw + jnp.dot(e, h, precision=hp)
    logits = jnp.dot(h, params["t2_w"], precision=hp) + params["t2_b"]
    return jax.nn.log_softmax(logits, axis=1)


def xavier_normal(key, out_f, in_f, gain):
    std = gain * (2.0 / (in_f + out_f)) ** 0.5
    return std * jax.random.normal(key, (out_f, in_f), dtype=jnp.float32)


# ----------------------------- main -------------------------------------------

if __name__ == "__main__":
    N, in_dim, hidden_dim, out_dim = 16, 16, 32, 8
    eps, layer_num = 0.3, 2

    key = jax.random.PRNGKey(0)
    keys = jax.random.split(key, 12)

    # deterministic synthetic graph
    upper = jax.random.bernoulli(keys[0], 0.3, (N, N))
    adj = jnp.logical_or(upper, upper.T)
    ring = (jnp.eye(N, k=1) + jnp.eye(N, k=-1)
            + jnp.eye(N, k=N - 1) + jnp.eye(N, k=-(N - 1))) > 0
    adj = jnp.logical_or(adj, ring)
    adj = jnp.where(jnp.eye(N, dtype=bool), False, adj).astype(jnp.float32)
    deg = adj.sum(axis=1)
    d = jnp.where(deg > 0, 1.0 / jnp.sqrt(jnp.maximum(deg, 1.0)), 0.0)
    d = d.reshape(N, 1).astype(jnp.float32)
    yn = jax.random.bernoulli(keys[1], 0.5, (N, N)).astype(jnp.float32)

    # input node features
    x = jax.random.normal(keys[2], (N, in_dim), dtype=jnp.float32)

    # parameters (mirroring FAGCN.__init__ / reset_parameters)
    gain = 1.414
    t1_w = xavier_normal(keys[3], hidden_dim, in_dim, gain).T       # (in, hidden)
    t1_b = jax.random.uniform(keys[4], (1, hidden_dim), jnp.float32,
                              -1.0 / in_dim ** 0.5, 1.0 / in_dim ** 0.5)
    t2_w = xavier_normal(keys[5], out_dim, hidden_dim, gain).T      # (hidden, out)
    t2_b = jax.random.uniform(keys[6], (1, out_dim), jnp.float32,
                              -1.0 / hidden_dim ** 0.5, 1.0 / hidden_dim ** 0.5)

    gate_w, gate_b, yes_w, no_w = [], [], [], []
    for i in range(layer_num):
        gwi = xavier_normal(keys[7 + 2 * i], 1, 2 * hidden_dim, gain)  # (1, 2H)
        gbi = jax.random.uniform(keys[8 + 2 * i], (), jnp.float32,
                                 -1.0 / (2 * hidden_dim) ** 0.5,
                                 1.0 / (2 * hidden_dim) ** 0.5)
        # split gate weight into (H, 2): col 0 = dst part, col 1 = src part
        gate_w.append(jnp.stack([gwi[0, :hidden_dim], gwi[0, hidden_dim:]], axis=1))
        gate_b.append(gbi)
        yes_w.append(jnp.float32(1.5))
        no_w.append(jnp.float32(-0.5))

    params = dict(t1_w=t1_w, t1_b=t1_b, t2_w=t2_w, t2_b=t2_b,
                  gate_w=gate_w, gate_b=gate_b, yes_w=yes_w, no_w=no_w)

    # Performance config (bf16 MXU operands for the e@h aggregation).
    out = fagcn_forward(x, params, adj, yn, d, eps, layer_num, mxu_bf16=True)
    out = jax.block_until_ready(out)
    assert out.shape == (N, out_dim)

    # Validation config (full f32 matmul) against the pure-JAX reference.
    out_f32 = fagcn_forward(x, params, adj, yn, d, eps, layer_num, mxu_bf16=False)
    out_f32 = jax.block_until_ready(out_f32)

    ref = fagcn_reference(x, params, adj, yn, d, eps, layer_num)
    assert jnp.allclose(out_f32, ref, rtol=1e-3, atol=1e-3), \
        float(jnp.max(jnp.abs(out_f32 - ref)))
    # bf16 MXU operands -> relaxed tolerance (per performance review).
    assert jnp.allclose(out, ref, rtol=5e-2, atol=1e-1), \
        float(jnp.max(jnp.abs(out - ref)))

    print("KERNEL_OK")
</pallas_src>

<mosaic_0001>
module attributes {stable_mosaic.version = 11 : i64} {
  func.func @_fagcn_kernel(%arg0: i32, %arg1: i32, %arg2: memref<16x16xf32, #tpu.memory_space<vmem>>, %arg3: memref<16x32xf32, #tpu.memory_space<vmem>>, %arg4: memref<1x32xf32, #tpu.memory_space<vmem>>, %arg5: memref<2x1x32xf32, #tpu.memory_space<vmem>>, %arg6: memref<2x8x32xf32, #tpu.memory_space<vmem>>, %arg7: memref<16x16xf32, #tpu.memory_space<vmem>>, %arg8: memref<32x128xf32, #tpu.memory_space<vmem>>, %arg9: memref<1x128xf32, #tpu.memory_space<vmem>>, %arg10: memref<7xf32, #tpu.memory_space<smem>>, %arg11: memref<16x128xf32, #tpu.memory_space<vmem>>, %arg12: memref<16x32xf32, #tpu.memory_space<vmem>>, %arg13: memref<16x32xf32, #tpu.memory_space<vmem>>, %arg14: memref<16x32xf32, #tpu.memory_space<vmem>>, %arg15: memref<8x16xf32, #tpu.memory_space<vmem>>) attributes {dimension_semantics = [#tpu.dimension_semantics<arbitrary>, #tpu.dimension_semantics<arbitrary>], iteration_bounds = array<i64: 2, 1>, scalar_prefetch = 0 : i64, scratch_operands = 4 : i64, tpu.core_type = #tpu.core_type<tc>, window_params = [{pipeline_mode = #tpu.pipeline_mode<synchronous>, transform_indices = @transform_0, window_bounds = array<i64: 16, 16>}, {pipeline_mode = #tpu.pipeline_mode<synchronous>, transform_indices = @transform_1, window_bounds = array<i64: 16, 32>}, {pipeline_mode = #tpu.pipeline_mode<synchronous>, transform_indices = @transform_2, window_bounds = array<i64: 1, 32>}, {pipeline_mode = #tpu.pipeline_mode<synchronous>, transform_indices = @transform_3, window_bounds = array<i64: 2, 1, 32>}, {pipeline_mode = #tpu.pipeline_mode<synchronous>, transform_indices = @transform_4, window_bounds = array<i64: 2, 8, 32>}, {transform_indices = @transform_5, window_bounds = array<i64: 16, 16>}, {pipeline_mode = #tpu.pipeline_mode<synchronous>, transform_indices = @transform_6, window_bounds = array<i64: 32, 128>}, {pipeline_mode = #tpu.pipeline_mode<synchronous>, transform_indices = @transform_7, window_bounds = array<i64: 1, 128>}, {transform_indices = @transform_8, window_bounds = array<i64: 7>}, {pipeline_mode = #tpu.pipeline_mode<synchronous>, transform_indices = @transform_9, window_bounds = array<i64: 16, 128>}]} {
    %c0_i32 = arith.constant 0 : i32
    %0 = arith.cmpi eq, %arg0, %c0_i32 : i32
    %c0_i32_0 = arith.constant 0 : i32
    %1 = arith.cmpi eq, %arg1, %c0_i32_0 : i32
    %2 = arith.andi %0, %1 : i1
    %3 = arith.extui %2 : i1 to i32
    %c0_i32_1 = arith.constant 0 : i32
    %4 = arith.cmpi ne, %3, %c0_i32_1 : i32
    scf.if %4 {
      %c0_25 = arith.constant 0 : index
      %c0_26 = arith.constant 0 : index
      %67 = vector.load %arg2[%c0_25, %c0_26] : memref<16x16xf32, #tpu.memory_space<vmem>>, vector<16x16xf32>
      %c0_27 = arith.constant 0 : index
      %c0_28 = arith.constant 0 : index
      %68 = vector.load %arg3[%c0_27, %c0_28] : memref<16x32xf32, #tpu.memory_space<vmem>>, vector<16x32xf32>
      %cst_29 = arith.constant dense<0.000000e+00> : vector<16x32xf32>
      %69 = tpu.matmul %67, %68, %cst_29 {dimension_numbers = #tpu.dot_dimension_numbers<[1], [0], [0], [1], [0, 0, 1, 1], [], []>} : vector<16x16xf32>, vector<16x32xf32>, vector<16x32xf32> -> vector<16x32xf32>
      %c0_30 = arith.constant 0 : index
      %c0_31 = arith.constant 0 : index
      %70 = vector.load %arg4[%c0_30, %c0_31] : memref<1x32xf32, #tpu.memory_space<vmem>>, vector<1x32xf32>
      %71 = vector.broadcast %70 : vector<1x32xf32> to vector<16x32xf32>
      %72 = arith.addf %69, %71 : vector<16x32xf32>
      %cst_32 = arith.constant 0.000000e+00 : f32
      %73 = vector.broadcast %cst_32 : f32 to vector<16x32xf32>
      %74 = arith.maximumf %72, %73 : vector<16x32xf32>
      %c0_33 = arith.constant 0 : index
      %c0_34 = arith.constant 0 : index
      %75 = vector.load %arg12[%c0_33, %c0_34] : memref<16x32xf32, #tpu.memory_space<vmem>>, vector<16x32xf32>
      tpu.vector_store %arg12[%c0_33, %c0_34], %74 {strides = array<i32>} : memref<16x32xf32, #tpu.memory_space<vmem>>, vector<16x32xf32>,
      %c0_35 = arith.constant 0 : index
      %c0_36 = arith.constant 0 : index
      %76 = vector.load %arg14[%c0_35, %c0_36] : memref<16x32xf32, #tpu.memory_space<vmem>>, vector<16x32xf32>
      tpu.vector_store %arg14[%c0_35, %c0_36], %74 {strides = array<i32>} : memref<16x32xf32, #tpu.memory_space<vmem>>, vector<16x32xf32>,
    } else {
    }
    %c0_i32_2 = arith.constant 0 : i32
    %5 = arith.cmpi eq, %arg1, %c0_i32_2 : i32
    %6 = arith.extui %5 : i1 to i32
    %c0_i32_3 = arith.constant 0 : i32
    %7 = arith.cmpi ne, %6, %c0_i32_3 : i32
    scf.if %7 {
      %67 = arith.index_cast %arg0 : i32 to index
      %c0_25 = arith.constant 0 : index
      %c0_26 = arith.constant 0 : index
      %68 = vector.load %arg6[%67, %c0_25, %c0_26] : memref<2x8x32xf32, #tpu.memory_space<vmem>>, vector<1x8x32xf32>
      %69 = vector.shape_cast %68 : vector<1x8x32xf32> to vector<8x32xf32>
      %c0_27 = arith.constant 0 : index
      %c0_28 = arith.constant 0 : index
      %70 = vector.load %arg12[%c0_27, %c0_28] : memref<16x32xf32, #tpu.memory_space<vmem>>, vector<16x32xf32>
      %cst_29 = arith.constant dense<0.000000e+00> : vector<8x16xf32>
      %71 = tpu.matmul %69, %70, %cst_29 {dimension_numbers = #tpu.dot_dimension_numbers<[1], [1], [0], [0], [0, 0, 1, 0], [], []>} : vector<8x32xf32>, vector<16x32xf32>, vector<8x16xf32> -> vector<8x16xf32>
      %c0_30 = arith.constant 0 : index
      %c0_31 = arith.constant 0 : index
      %72 = vector.load %arg15[%c0_30, %c0_31] : memref<8x16xf32, #tpu.memory_space<vmem>>, vector<8x16xf32>
      tpu.vector_store %arg15[%c0_30, %c0_31], %71 {strides = array<i32>} : memref<8x16xf32, #tpu.memory_space<vmem>>, vector<8x16xf32>,
    } else {
    }
    %c0 = arith.constant 0 : index
    %8 = memref.load %arg10[%c0] : memref<7xf32, #tpu.memory_space<smem>>
    %c3_i32 = arith.constant 3 : i32
    %9 = arith.muli %c3_i32, %arg0 : i32
    %c1_i32 = arith.constant 1 : i32
    %10 = arith.addi %c1_i32, %9 : i32
    %11 = arith.index_cast %10 : i32 to index
    %12 = memref.load %arg10[%11] : memref<7xf32, #tpu.memory_space<smem>>
    %c3_i32_4 = arith.constant 3 : i32
    %13 = arith.muli %c3_i32_4, %arg0 : i32
    %c2_i32 = arith.constant 2 : i32
    %14 = arith.addi %c2_i32, %13 : i32
    %15 = arith.index_cast %14 : i32 to index
    %16 = memref.load %arg10[%15] : memref<7xf32, #tpu.memory_space<smem>>
    %c3_i32_5 = arith.constant 3 : i32
    %17 = arith.muli %c3_i32_5, %arg0 : i32
    %c3_i32_6 = arith.constant 3 : i32
    %18 = arith.addi %c3_i32_6, %17 : i32
    %19 = arith.index_cast %18 : i32 to index
    %20 = memref.load %arg10[%19] : memref<7xf32, #tpu.memory_space<smem>>
    %c16_i32 = arith.constant 16 : i32
    %21 = arith.muli %arg1, %c16_i32 : i32
    %22 = tpu.assume_multiple %21, 16 : i32
    %c0_7 = arith.constant 0 : index
    %c0_8 = arith.constant 0 : index
    %23 = vector.load %arg12[%c0_7, %c0_8] : memref<16x32xf32, #tpu.memory_space<vmem>>, vector<16x32xf32>
    %24 = arith.index_cast %22 : i32 to index
    %c0_9 = arith.constant 0 : index
    %25 = vector.load %arg12[%24, %c0_9] : memref<16x32xf32, #tpu.memory_space<vmem>>, vector<16x32xf32>
    %26 = arith.index_cast %arg0 : i32 to index
    %c0_10 = arith.constant 0 : index
    %c0_11 = arith.constant 0 : index
    %27 = vector.load %arg5[%26, %c0_10, %c0_11] : memref<2x1x32xf32, #tpu.memory_space<vmem>>, vector<1x1x32xf32>
    %28 = vector.shape_cast %27 : vector<1x1x32xf32> to vector<1x32xf32>
    %29 = vector.broadcast %28 : vector<1x32xf32> to vector<16x32xf32>
    %30 = arith.mulf %25, %29 : vector<16x32xf32>
    %cst = arith.constant dense<0.000000e+00> : vector<16xf32>
    %31 = vector.multi_reduction <add>, %30, %cst [1] : vector<16x32xf32> to vector<16xf32>
    %32 = vector.shape_cast %31 : vector<16xf32> to vector<16x1xf32>
    %c0_12 = arith.constant 0 : index
    %c0_13 = arith.constant 0 : index
    %33 = vector.load %arg15[%c0_12, %c0_13] : memref<8x16xf32, #tpu.memory_space<vmem>>, vector<1x16xf32>
    %34 = vector.broadcast %32 : vector<16x1xf32> to vector<16x16xf32>
    %35 = vector.broadcast %33 : vector<1x16xf32> to vector<16x16xf32>
    %36 = arith.addf %34, %35 : vector<16x16xf32>
    %37 = vector.broadcast %12 : f32 to vector<16x16xf32>
    %38 = arith.addf %36, %37 : vector<16x16xf32>
    %39 = math.tanh %38 : vector<16x16xf32>
    %c0_14 = arith.constant 0 : index
    %c0_15 = arith.constant 0 : index
    %40 = vector.load %arg7[%c0_14, %c0_15] : memref<16x16xf32, #tpu.memory_space<vmem>>, vector<16x16xf32>
    %41 = math.absf %40 : vector<16x16xf32>
    %cst_16 = arith.constant 0.000000e+00 : f32
    %42 = vector.broadcast %cst_16 : f32 to vector<16x16xf32>
    %43 = arith.cmpf ogt, %40, %42 : vector<16x16xf32>
    %44 = vector.broadcast %16 : f32 to vector<16x16xf32>
    %45 = vector.broadcast %20 : f32 to vector<16x16xf32>
    %46 = arith.select %43, %44, %45 : vector<16x16xi1>, vector<16x16xf32>
    %47 = arith.addf %39, %46 : vector<16x16xf32>
    %48 = arith.mulf %47, %41 : vector<16x16xf32>
    %49 = arith.truncf %48 : vector<16x16xf32> to vector<16x16xbf16>
    %50 = arith.truncf %23 : vector<16x32xf32> to vector<16x32xbf16>
    %cst_17 = arith.constant dense<0.000000e+00> : vector<16x32xf32>
    %51 = tpu.matmul %49, %50, %cst_17 {dimension_numbers = #tpu.dot_dimension_numbers<[1], [0], [0], [1], [0, 0, 1, 1], [], []>} : vector<16x16xbf16>, vector<16x32xbf16>, vector<16x32xf32> -> vector<16x32xf32>
    %52 = arith.index_cast %22 : i32 to index
    %c0_18 = arith.constant 0 : index
    %53 = vector.load %arg14[%52, %c0_18] : memref<16x32xf32, #tpu.memory_space<vmem>>, vector<16x32xf32>
    %54 = vector.broadcast %8 : f32 to vector<16x32xf32>
    %55 = arith.mulf %54, %53 : vector<16x32xf32>
    %56 = arith.addf %55, %51 : vector<16x32xf32>
    %57 = arith.index_cast %22 : i32 to index
    %c0_19 = arith.constant 0 : index
    %58 = vector.load %arg13[%57, %c0_19] : memref<16x32xf32, #tpu.memory_space<vmem>>, vector<16x32xf32>
    tpu.vector_store %arg13[%57, %c0_19], %56 {strides = array<i32>} : memref<16x32xf32, #tpu.memory_space<vmem>>, vector<16x32xf32>,
    %c0_i32_20 = arith.constant 0 : i32
    %59 = arith.cmpi eq, %arg1, %c0_i32_20 : i32
    %60 = arith.extui %59 : i1 to i32
    %c0_i32_21 = arith.constant 0 : i32
    %61 = arith.cmpi ne, %60, %c0_i32_21 : i32
    scf.if %61 {
      %c0_25 = arith.constant 0 : index
      %c0_26 = arith.constant 0 : index
      %67 = vector.load %arg13[%c0_25, %c0_26] : memref<16x32xf32, #tpu.memory_space<vmem>>, vector<16x32xf32>
      %c0_27 = arith.constant 0 : index
      %c0_28 = arith.constant 0 : index
      %68 = vector.load %arg12[%c0_27, %c0_28] : memref<16x32xf32, #tpu.memory_space<vmem>>, vector<16x32xf32>
      tpu.vector_store %arg12[%c0_27, %c0_28], %67 {strides = array<i32>} : memref<16x32xf32, #tpu.memory_space<vmem>>, vector<16x32xf32>,
    } else {
    }
    %c1_i32_22 = arith.constant 1 : i32
    %62 = arith.cmpi eq, %arg0, %c1_i32_22 : i32
    %c0_i32_23 = arith.constant 0 : i32
    %63 = arith.cmpi eq, %arg1, %c0_i32_23 : i32
    %64 = arith.andi %62, %63 : i1
    %65 = arith.extui %64 : i1 to i32
    %c0_i32_24 = arith.constant 0 : i32
    %66 = arith.cmpi ne, %65, %c0_i32_24 : i32
    scf.if %66 {
      %c0_25 = arith.constant 0 : index
      %c0_26 = arith.constant 0 : index
      %67 = vector.load %arg13[%c0_25, %c0_26] : memref<16x32xf32, #tpu.memory_space<vmem>>, vector<16x32xf32>
      %c0_27 = arith.constant 0 : index
      %c0_28 = arith.constant 0 : index
      %68 = vector.load %arg8[%c0_27, %c0_28] : memref<32x128xf32, #tpu.memory_space<vmem>>, vector<32x128xf32>
      %cst_29 = arith.constant dense<0.000000e+00> : vector<16x128xf32>
      %69 = tpu.matmul %67, %68, %cst_29 {dimension_numbers = #tpu.dot_dimension_numbers<[1], [0], [0], [1], [0, 0, 1, 1], [], []>} : vector<16x32xf32>, vector<32x128xf32>, vector<16x128xf32> -> vector<16x128xf32>
      %c0_30 = arith.constant 0 : index
      %c0_31 = arith.constant 0 : index
      %70 = vector.load %arg9[%c0_30, %c0_31] : memref<1x128xf32, #tpu.memory_space<vmem>>, vector<1x128xf32>
      %71 = vector.broadcast %70 : vector<1x128xf32> to vector<16x128xf32>
      %72 = arith.addf %69, %71 : vector<16x128xf32>
      %cst_32 = arith.constant dense<0xFF800000> : vector<16xf32>
      %73 = vector.multi_reduction <maximumf>, %72, %cst_32 [1] : vector<16x128xf32> to vector<16xf32>
      %74 = vector.shape_cast %73 : vector<16xf32> to vector<16x1xf32>
      %75 = vector.broadcast %74 : vector<16x1xf32> to vector<16x128xf32>
      %76 = arith.subf %72, %75 : vector<16x128xf32>
      %77 = math.exp %76 : vector<16x128xf32>
      %cst_33 = arith.constant dense<0.000000e+00> : vector<16xf32>
      %78 = vector.multi_reduction <add>, %77, %cst_33 [1] : vector<16x128xf32> to vector<16xf32>
      %79 = vector.shape_cast %78 : vector<16xf32> to vector<16x1xf32>
      %80 = math.log %79 : vector<16x1xf32>
      %81 = vector.broadcast %80 : vector<16x1xf32> to vector<16x128xf32>
      %82 = arith.subf %76, %81 : vector<16x128xf32>
      %c0_34 = arith.constant 0 : index
      %c0_35 = arith.constant 0 : index
      %83 = vector.load %arg11[%c0_34, %c0_35] : memref<16x128xf32, #tpu.memory_space<vmem>>, vector<16x128xf32>
      tpu.vector_store %arg11[%c0_34, %c0_35], %82 {strides = array<i32>} : memref<16x128xf32, #tpu.memory_space<vmem>>, vector<16x128xf32>,
    } else {
    }
    return
  }
  func.func @transform_0(%arg0: i32, %arg1: i32) -> (i32, i32) {
    %c0_i32 = arith.constant 0 : i32
    %c0_i32_0 = arith.constant 0 : i32
    %c0_i32_1 = arith.constant 0 : i32
    return %c0_i32, %c0_i32_0 : i32, i32
  }
  func.func @transform_1(%arg0: i32, %arg1: i32) -> (i32, i32) {
    %c0_i32 = arith.constant 0 : i32
    %c0_i32_0 = arith.constant 0 : i32
    %c0_i32_1 = arith.constant 0 : i32
    return %c0_i32, %c0_i32_0 : i32, i32
  }
  func.func @transform_2(%arg0: i32, %arg1: i32) -> (i32, i32) {
    %c0_i32 = arith.constant 0 : i32
    %c0_i32_0 = arith.constant 0 : i32
    %c0_i32_1 = arith.constant 0 : i32
    return %c0_i32, %c0_i32_0 : i32, i32
  }
  func.func @transform_3(%arg0: i32, %arg1: i32) -> (i32, i32, i32) {
    %c0_i32 = arith.constant 0 : i32
    %c0_i32_0 = arith.constant 0 : i32
    %c0_i32_1 = arith.constant 0 : i32
    %c0_i32_2 = arith.constant 0 : i32
    return %c0_i32, %c0_i32_0, %c0_i32_1 : i32, i32, i32
  }
  func.func @transform_4(%arg0: i32, %arg1: i32) -> (i32, i32, i32) {
    %c0_i32 = arith.constant 0 : i32
    %c0_i32_0 = arith.constant 0 : i32
    %c0_i32_1 = arith.constant 0 : i32
    %c0_i32_2 = arith.constant 0 : i32
    return %c0_i32, %c0_i32_0, %c0_i32_1 : i32, i32, i32
  }
  func.func @transform_5(%arg0: i32, %arg1: i32) -> (i32, i32) {
    %c0_i32 = arith.constant 0 : i32
    %c0_i32_0 = arith.constant 0 : i32
    return %arg1, %c0_i32 : i32, i32
  }
  func.func @transform_6(%arg0: i32, %arg1: i32) -> (i32, i32) {
    %c0_i32 = arith.constant 0 : i32
    %c0_i32_0 = arith.constant 0 : i32
    %c0_i32_1 = arith.constant 0 : i32
    return %c0_i32, %c0_i32_0 : i32, i32
  }
  func.func @transform_7(%arg0: i32, %arg1: i32) -> (i32, i32) {
    %c0_i32 = arith.constant 0 : i32
    %c0_i32_0 = arith.constant 0 : i32
    %c0_i32_1 = arith.constant 0 : i32
    return %c0_i32, %c0_i32_0 : i32, i32
  }
  func.func @transform_8(%arg0: i32, %arg1: i32) -> i32 {
    %c0_i32 = arith.constant 0 : i32
    %c0_i32_0 = arith.constant 0 : i32
    return %c0_i32 : i32
  }
  func.func @transform_9(%arg0: i32, %arg1: i32) -> (i32, i32) {
    %c0_i32 = arith.constant 0 : i32
    %c0_i32_0 = arith.constant 0 : i32
    %c0_i32_1 = arith.constant 0 : i32
    return %c0_i32, %c0_i32_0 : i32, i32
  }
}

</mosaic_0001>

<llo_original>
// kernel: tpu_custom_call.1
$region0: #{tpu_custom_call.1}
  #allocation0 [shape = 'u32[]', space=smem, size = 0x4, offset = 0x4, fixed_abs, tag = 'smem constant byte address 0x4 - core index']
  #allocation1 [shape = 'u32[72,128]{1,0:T(1,128)}', space=vmem, size = 0x9000, scoped, tag = 'internal scratch']
  #allocation2 [shape = 'f32[16,32]{1,0:T(8,128)}', space=vmem, size = 0x2000, scoped, tag = 'scratch operand']
  #allocation3 [shape = 'f32[16,32]{1,0:T(8,128)}', space=vmem, size = 0x2000, scoped, tag = 'scratch operand']
  #allocation4 [shape = 'f32[16,32]{1,0:T(8,128)}', space=vmem, size = 0x2000, scoped, tag = 'scratch operand']
  #allocation5 [shape = 'f32[8,16]{1,0:T(8,128)}', space=vmem, size = 0x1000, scoped, tag = 'scratch operand']
  %s0 = inlined_call_operand.hbm [shape: f32[16,16], index: 0, kind: input, shape index: {}]
  %s1 = inlined_call_operand.hbm [shape: f32[16,32], index: 1, kind: input, shape index: {}]
  %s2 = inlined_call_operand.hbm [shape: f32[1,32], index: 2, kind: input, shape index: {}]
  %s3 = inlined_call_operand.vmem [shape: f32[2,1,32], index: 3, kind: input, shape index: {}]
  %s4 = inlined_call_operand.hbm [shape: f32[2,8,32], index: 4, kind: input, shape index: {}]
  %s5 = inlined_call_operand.hbm [shape: f32[16,16], index: 5, kind: input, shape index: {}]
  %s6 = inlined_call_operand.hbm [shape: f32[32,128], index: 6, kind: input, shape index: {}]
  %s7 = inlined_call_operand.vmem [shape: f32[1,128], index: 7, kind: input, shape index: {}]
  %s8 = inlined_call_operand.vmem [shape: f32[7], index: 8, kind: input, shape index: {}]
  %s9 = inlined_call_operand.hbm [shape: f32[16,128], index: 9, kind: output, shape index: {}]
  %s10 = sld [smem:[#allocation0]]
  $region113: #{tpu_custom_call.1} parent=0
    _
  %s12 = ssub.s32 1, %s10
  %s13 = scalar_select 0, %s12, %s10
  $region1: #{tpu_custom_call.1} parent=0
    #allocation6 [shape = 'u8[8192]{0}', space=vmem, size = 0x2000, scoped, tag = 'input window, operand 0, single buffered']
    #allocation7 [shape = 's32[2]{0}', space=sflag, size = 0x8, scoped, tag = 'scoped memory for tpu_custom_call.1']
    #allocation8 [shape = 's32[2]{0}', space=sflag, size = 0x8, scoped, tag = 'scoped memory for tpu_custom_call.1']
    #allocation9 [shape = 's32[2]{0}', space=sflag, size = 0x8, scoped, tag = 'scoped memory for tpu_custom_call.1']
    #allocation10 [shape = 'u8[8192]{0}', space=vmem, size = 0x2000, scoped, tag = 'input window, operand 1, single buffered']
    #allocation11 [shape = 's32[1]{0}', space=sflag, size = 0x4, scoped, tag = 'scoped memory for tpu_custom_call.1']
    #allocation12 [shape = 'u8[512]{0}', space=vmem, size = 0x400, scoped, tag = 'input window, operand 2, single buffered']
    #allocation13 [shape = 'u8[8192]{0}', space=vmem, size = 0x2000, scoped, tag = 'input window, operand 4, single buffered']
    #allocation14 [shape = 's32[1]{0}', space=sflag, size = 0x4, scoped, tag = 'scoped memory for tpu_custom_call.1']
    #allocation15 [shape = 'u8[8192]{0}', space=vmem, size = 0x2000, scoped, tag = 'input window, operand 5, single buffered']
    #allocation16 [shape = 'u8[16384]{0}', space=vmem, size = 0x4000, scoped, tag = 'input window, operand 6, single buffered']
    #allocation17 [shape = 's32[1]{0}', space=sflag, size = 0x4, scoped, tag = 'scoped memory for tpu_custom_call.1']
    #allocation18 [shape = 'u8[512]{0}', space=smem, size = 0x200, scoped, tag = 'input window, operand 8, single buffered']
    #allocation19 [shape = 'u8[8192]{0}', space=vmem, size = 0x2000, scoped, tag = 'output window, operand 0, single buffered']
    %14 = vsyncpa [#allocation7], 0
    %15 = vsyncpa [#allocation11], 0
    %16 = vsyncpa [#allocation14], 0
    %17 = vsyncpa [#allocation17], 0
    %18 = vsyncpa [#allocation9], 0
    %19 = vsyncpa [#allocation8], 0
    loop: start=0, step=1, limit=4
    $region2: #{tpu_custom_call.1} parent=1 // loop_pre_header
      _
    $region3: #{tpu_custom_call.1} parent=1 // loop_header
      %s21 = sphi 0, %s25
      %p22 = scmp.ge.s32.totalorder %s21, 4
      %s28 = sphi 0, %s40
      %s29 = sphi 0, %s36
      %s30 = sphi 0, %s28
      %s31 = sphi 0, %s29
      %s32 = sphi 0, %s30
      %s33 = sphi 0, %s31
      %s41 = sphi 0, %s41
      %s43 = sphi 0, %s41
      %s44 = sphi 0, %s43
      %s58 = sphi 0, %s44
      %s62 = sphi 0, %s62
      %s64 = sphi 0, %s62
      %s65 = sphi 0, %s64
      %s79 = sphi 0, %s65
      %s83 = sphi 0, %s83
      %s85 = sphi 0, %s83
      %s86 = sphi 0, %s85
      %s100 = sphi 0, %s86
      %s104 = sphi 0, %s104
      %s106 = sphi 0, %s104
      %s107 = sphi 0, %s106
      %s121 = sphi 0, %s107
      %s125 = sphi 0, %s125
      %s127 = sphi 0, %s125
      %s128 = sphi 0, %s127
      %s142 = sphi 0, %s128
      %s148 = sphi 0, %s150
      %s151 = sphi 0, %s148
      %s152 = sphi 0, %s151
      %s168 = sphi 0, %s152
      %s172 = sphi 0, %s172
      %s174 = sphi 0, %s172
      %s175 = sphi 0, %s174
      %s189 = sphi 0, %s175
      %s193 = sphi 0, %s193
      %s195 = sphi 0, %s193
      %s196 = sphi 0, %s195
      %s210 = sphi 0, %s196
      %s214 = sphi 0, %s214
      %s216 = sphi 0, %s214
      %s217 = sphi 0, %s216
      %s231 = sphi 0, %s217
      %s235 = sphi 0, %s235
      %s237 = sphi 0, %s235
      %s238 = sphi 0, %s237
      %s252 = sphi 0, %s238
    $region4: #{tpu_custom_call.1} parent=1 // loop_header_branch
      %24 = sbr.rel (%p22) target = $region8
    $region5: #{tpu_custom_call.1} parent=1 // loop_body
      %s26 = ssub.s32 %s21, 1
      %s27 = ssub.s32 %s21, 2
      %s34 = sadd.s32 1, %s29
      %p35 = scmp.ge.s32.totalorder %s34, 1
      %s36 = scalar_select %p35, 0, %s34
      %s37 = sadd.s32 1, %s28
      %s38 = scalar_select %p35, %s37, %s28
      %p39 = scmp.ge.s32.totalorder %s38, 2
      %s40 = scalar_select %p39, 0, %s38
      %s42 = sadd.s32 %s41, 1
      %p45 = scmp.eq.s32.totalorder %s21, 1
      %p46 = scmp.ne.s32.totalorder %s41, %s43
      %p47 = scmp.eq.s32.totalorder %s21, 0
      %p48 = por %p46, %p47
      %p49 = scmp.ne.s32.totalorder %s41, %s43
      %p50 = scmp.eq.s32.totalorder %s26, 1
      %p51 = por %p49, %p50
      %p52 = scmp.ne.s32.totalorder %s43, %s44
      %p53 = scmp.eq.s32.totalorder %s26, 0
      %p54 = por %p52, %p53
      %p55 = scmp.ne.s32.totalorder %s43, %s44
      %p56 = scmp.eq.s32.totalorder %s27, 1
      %p57 = por %p55, %p56
      %p59 = scmp.ne.s32.totalorder %s44, %s58
      %p60 = scmp.eq.s32.totalorder %s27, 0
      %p61 = por %p59, %p60
      %s63 = sadd.s32 %s62, 1
      %p66 = scmp.eq.s32.totalorder %s21, 1
      %p67 = scmp.ne.s32.totalorder %s62, %s64
      %p68 = scmp.eq.s32.totalorder %s21, 0
      %p69 = por %p67, %p68
      %p70 = scmp.ne.s32.totalorder %s62, %s64
      %p71 = scmp.eq.s32.totalorder %s26, 1
      %p72 = por %p70, %p71
      %p73 = scmp.ne.s32.totalorder %s64, %s65
      %p74 = scmp.eq.s32.totalorder %s26, 0
      %p75 = por %p73, %p74
      %p76 = scmp.ne.s32.totalorder %s64, %s65
      %p77 = scmp.eq.s32.totalorder %s27, 1
      %p78 = por %p76, %p77
      %p80 = scmp.ne.s32.totalorder %s65, %s79
      %p81 = scmp.eq.s32.totalorder %s27, 0
      %p82 = por %p80, %p81
      %s84 = sadd.s32 %s83, 1
      %p87 = scmp.eq.s32.totalorder %s21, 1
      %p88 = scmp.ne.s32.totalorder %s83, %s85
      %p89 = scmp.eq.s32.totalorder %s21, 0
      %p90 = por %p88, %p89
      %p91 = scmp.ne.s32.totalorder %s83, %s85
      %p92 = scmp.eq.s32.totalorder %s26, 1
      %p93 = por %p91, %p92
      %p94 = scmp.ne.s32.totalorder %s85, %s86
      %p95 = scmp.eq.s32.totalorder %s26, 0
      %p96 = por %p94, %p95
      %p97 = scmp.ne.s32.totalorder %s85, %s86
      %p98 = scmp.eq.s32.totalorder %s27, 1
      %p99 = por %p97, %p98
      %p101 = scmp.ne.s32.totalorder %s86, %s100
      %p102 = scmp.eq.s32.totalorder %s27, 0
      %p103 = por %p101, %p102
      %s105 = sadd.s32 %s104, 1
      %p108 = scmp.eq.s32.totalorder %s21, 1
      %p109 = scmp.ne.s32.totalorder %s104, %s106
      %p110 = scmp.eq.s32.totalorder %s21, 0
      %p111 = por %p109, %p110
      %p112 = scmp.ne.s32.totalorder %s104, %s106
      %p113 = scmp.eq.s32.totalorder %s26, 1
      %p114 = por %p112, %p113
      %p115 = scmp.ne.s32.totalorder %s106, %s107
      %p116 = scmp.eq.s32.totalorder %s26, 0
      %p117 = por %p115, %p116
      %p118 = scmp.ne.s32.totalorder %s106, %s107
      %p119 = scmp.eq.s32.totalorder %s27, 1
      %p120 = por %p118, %p119
      %p122 = scmp.ne.s32.totalorder %s107, %s121
      %p123 = scmp.eq.s32.totalorder %s27, 0
      %p124 = por %p122, %p123
      %s126 = sadd.s32 %s125, 1
      %p129 = scmp.eq.s32.totalorder %s21, 1
      %p130 = scmp.ne.s32.totalorder %s125, %s127
      %p131 = scmp.eq.s32.totalorder %s21, 0
      %p132 = por %p130, %p131
      %p133 = scmp.ne.s32.totalorder %s125, %s127
      %p134 = scmp.eq.s32.totalorder %s26, 1
      %p135 = por %p133, %p134
      %p136 = scmp.ne.s32.totalorder %s127, %s128
      %p137 = scmp.eq.s32.totalorder %s26, 0
      %p138 = por %p136, %p137
      %p139 = scmp.ne.s32.totalorder %s127, %s128
      %p140 = scmp.eq.s32.totalorder %s27, 1
      %p141 = por %p139, %p140
      %p143 = scmp.ne.s32.totalorder %s128, %s142
      %p144 = scmp.eq.s32.totalorder %s27, 0
      %p145 = por %p143, %p144
      %s146 = ssub.s32 %s29, %s36
      %p147 = scmp.eq.s32.totalorder %s146, 0
      %s149 = sadd.s32 %s148, 1
      %s150 = scalar_select %p147, %s148, %s149
      %p153 = pneg %p147
      %p154 = scmp.eq.s32.totalorder %s21, 1
      %p155 = por %p153, %p154
      %p156 = scmp.ne.s32.totalorder %s148, %s151
      %p157 = scmp.eq.s32.totalorder %s21, 0
      %p158 = por %p156, %p157
      %p159 = scmp.ne.s32.totalorder %s148, %s151
      %p160 = scmp.eq.s32.totalorder %s26, 1
      %p161 = por %p159, %p160
      %p162 = scmp.ne.s32.totalorder %s151, %s152
      %p163 = scmp.eq.s32.totalorder %s26, 0
      %p164 = por %p162, %p163
      %p165 = scmp.ne.s32.totalorder %s151, %s152
      %p166 = scmp.eq.s32.totalorder %s27, 1
      %p167 = por %p165, %p166
      %p169 = scmp.ne.s32.totalorder %s152, %s168
      %p170 = scmp.eq.s32.totalorder %s27, 0
      %p171 = por %p169, %p170
      %s173 = sadd.s32 %s172, 1
      %p176 = scmp.eq.s32.totalorder %s21, 1
      %p177 = scmp.ne.s32.totalorder %s172, %s174
      %p178 = scmp.eq.s32.totalorder %s21, 0
      %p179 = por %p177, %p178
      %p180 = scmp.ne.s32.totalorder %s172, %s174
      %p181 = scmp.eq.s32.totalorder %s26, 1
      %p182 = por %p180, %p181
      %p183 = scmp.ne.s32.totalorder %s174, %s175
      %p184 = scmp.eq.s32.totalorder %s26, 0
      %p185 = por %p183, %p184
      %p186 = scmp.ne.s32.totalorder %s174, %s175
      %p187 = scmp.eq.s32.totalorder %s27, 1
      %p188 = por %p186, %p187
      %p190 = scmp.ne.s32.totalorder %s175, %s189
      %p191 = scmp.eq.s32.totalorder %s27, 0
      %p192 = por %p190, %p191
      %s194 = sadd.s32 %s193, 1
      %p197 = scmp.eq.s32.totalorder %s21, 1
      %p198 = scmp.ne.s32.totalorder %s193, %s195
      %p199 = scmp.eq.s32.totalorder %s21, 0
      %p200 = por %p198, %p199
      %p201 = scmp.ne.s32.totalorder %s193, %s195
      %p202 = scmp.eq.s32.totalorder %s26, 1
      %p203 = por %p201, %p202
      %p204 = scmp.ne.s32.totalorder %s195, %s196
      %p205 = scmp.eq.s32.totalorder %s26, 0
      %p206 = por %p204, %p205
      %p207 = scmp.ne.s32.totalorder %s195, %s196
      %p208 = scmp.eq.s32.totalorder %s27, 1
      %p209 = por %p207, %p208
      %p211 = scmp.ne.s32.totalorder %s196, %s210
      %p212 = scmp.eq.s32.totalorder %s27, 0
      %p213 = por %p211, %p212
      %s215 = sadd.s32 %s214, 1
      %p218 = scmp.eq.s32.totalorder %s21, 1
      %p219 = scmp.ne.s32.totalorder %s214, %s216
      %p220 = scmp.eq.s32.totalorder %s21, 0
      %p221 = por %p219, %p220
      %p222 = scmp.ne.s32.totalorder %s214, %s216
      %p223 = scmp.eq.s32.totalorder %s26, 1
      %p224 = por %p222, %p223
      %p225 = scmp.ne.s32.totalorder %s216, %s217
      %p226 = scmp.eq.s32.totalorder %s26, 0
      %p227 = por %p225, %p226
      %p228 = scmp.ne.s32.totalorder %s216, %s217
      %p229 = scmp.eq.s32.totalorder %s27, 1
      %p230 = por %p228, %p229
      %p232 = scmp.ne.s32.totalorder %s217, %s231
      %p233 = scmp.eq.s32.totalorder %s27, 0
      %p234 = por %p232, %p233
      %s236 = sadd.s32 %s235, 1
      %p239 = scmp.eq.s32.totalorder %s21, 1
      %p240 = scmp.ne.s32.totalorder %s235, %s237
      %p241 = scmp.eq.s32.totalorder %s21, 0
      %p242 = por %p240, %p241
      %p243 = scmp.ne.s32.totalorder %s235, %s237
      %p244 = scmp.eq.s32.totalorder %s26, 1
      %p245 = por %p243, %p244
      %p246 = scmp.ne.s32.totalorder %s237, %s238
      %p247 = scmp.eq.s32.totalorder %s26, 0
      %p248 = por %p246, %p247
      %p249 = scmp.ne.s32.totalorder %s237, %s238
      %p250 = scmp.eq.s32.totalorder %s27, 1
      %p251 = por %p249, %p250
      %p253 = scmp.ne.s32.totalorder %s238, %s252
      %p254 = scmp.eq.s32.totalorder %s27, 0
      %p255 = por %p253, %p254
      %p256 = scmp.le.s32.totalorder 1, %s21
      %p257 = scmp.lt.s32.totalorder %s21, 3
      %p258 = pnand %p256, %p257
      %p259 = pneg %p258
      // Predicated region
      $region9: #{tpu_custom_call.1} parent=5 // pred_check
        _
      $region10: #{tpu_custom_call.1} parent=5 // pred_check_branch
        %261 = sbr.rel (%p258) target = $region12
      $region11: #{tpu_custom_call.1} parent=5 // pred_region
        %s262 = ssub.s32 %s21, 1
        // Predicated region
        $region13: #{tpu_custom_call.1} parent=11 // pred_check
          %p263 = pneg %p54
        $region14: #{tpu_custom_call.1} parent=11 // pred_check_branch
          %265 = sbr.rel (%p263) target = $region16
        $region15: #{tpu_custom_call.1} parent=11 // pred_region
          %267 = vsyncadd [#allocation7], 0
          %s268 = sshll.u32 %s0, 4
          %s269 = int_to_ptr.hbm [resolvable:$true] %s268
          %s270 = sshll.u32 [#allocation6], 4
          %s271 = int_to_ptr.vmem [resolvable:$true] %s270
          %276 = dma.hbm_to_vmem [thread:$0]  %s269, 256, %s271, [#allocation7], 128, 128, 8
        $region16: #{tpu_custom_call.1} parent=11 // pred_fallthru
          _
        // Predicated region
        $region17: #{tpu_custom_call.1} parent=11 // pred_check
          %p277 = pneg %p75
        $region18: #{tpu_custom_call.1} parent=11 // pred_check_branch
          %279 = sbr.rel (%p277) target = $region20
        $region19: #{tpu_custom_call.1} parent=11 // pred_region
          %281 = vsyncadd [#allocation11], 0
          %s282 = sshll.u32 %s1, 4
          %s283 = int_to_ptr.hbm [resolvable:$true] %s282
          %s284 = sshll.u32 [#allocation10], 4
          %s285 = int_to_ptr.vmem [resolvable:$true] %s284
          %290 = dma.hbm_to_vmem [thread:$0]  %s283, 256, %s285, [#allocation11], 128, 128, 8
        $region20: #{tpu_custom_call.1} parent=11 // pred_fallthru
          _
        // Predicated region
        $region21: #{tpu_custom_call.1} parent=11 // pred_check
          %p291 = pneg %p96
        $region22: #{tpu_custom_call.1} parent=11 // pred_check_branch
          %293 = sbr.rel (%p291) target = $region24
        $region23: #{tpu_custom_call.1} parent=11 // pred_region
          %295 = vsyncadd [#allocation11], 0
          %s297 = sshll.u32 %s2, 4
          %s298 = int_to_ptr.hbm [resolvable:$true] %s297
          %s299 = sshll.u32 [#allocation12], 4
          %s300 = int_to_ptr.vmem [resolvable:$true] %s299
          %302 = dma.hbm_to_vmem [thread:$0]  %s298, 16, %s300, [#allocation11]
        $region24: #{tpu_custom_call.1} parent=11 // pred_fallthru
          _
        // Predicated region
        $region25: #{tpu_custom_call.1} parent=11 // pred_check
          %p303 = pneg %p117
        $region26: #{tpu_custom_call.1} parent=11 // pred_check_branch
          %305 = sbr.rel (%p303) target = $region28
        $region27: #{tpu_custom_call.1} parent=11 // pred_region
          _
        $region28: #{tpu_custom_call.1} parent=11 // pred_fallthru
          _
        // Predicated region
        $region29: #{tpu_custom_call.1} parent=11 // pred_check
          %p306 = pneg %p138
        $region30: #{tpu_custom_call.1} parent=11 // pred_check_branch
          %308 = sbr.rel (%p306) target = $region32
        $region31: #{tpu_custom_call.1} parent=11 // pred_region
          %310 = vsyncadd [#allocation14], 0
          %s311 = sshll.u32 %s4, 4
          %s312 = int_to_ptr.hbm [resolvable:$true] %s311
          %s313 = sshll.u32 [#allocation13], 4
          %s314 = int_to_ptr.vmem [resolvable:$true] %s313
          %319 = dma.hbm_to_vmem [thread:$0]  %s312, 256, %s314, [#allocation14], 128, 128, 8
        $region32: #{tpu_custom_call.1} parent=11 // pred_fallthru
          _
        // Predicated region
        $region33: #{tpu_custom_call.1} parent=11 // pred_check
          %p320 = pneg %p164
        $region34: #{tpu_custom_call.1} parent=11 // pred_check_branch
          %322 = sbr.rel (%p320) target = $region36
        $region35: #{tpu_custom_call.1} parent=11 // pred_region
          %s323 = smul.u32 2, %s31
          %325 = vsyncadd [#allocation14], 0
          %s326 = smul.addr %s323, 8
          %s327 = scalar_lea.hbm %s5, %s326
          %s328 = sshll.u32 %s327, 4
          %s329 = int_to_ptr.hbm [resolvable:$true] %s328
          %s330 = sshll.u32 [#allocation15], 4
          %s331 = int_to_ptr.vmem [resolvable:$true] %s330
          %336 = dma.hbm_to_vmem [thread:$0]  %s329, 256, %s331, [#allocation14], 128, 128, 8
        $region36: #{tpu_custom_call.1} parent=11 // pred_fallthru
          _
        // Predicated region
        $region37: #{tpu_custom_call.1} parent=11 // pred_check
          %p337 = pneg %p185
        $region38: #{tpu_custom_call.1} parent=11 // pred_check_branch
          %339 = sbr.rel (%p337) target = $region40
        $region39: #{tpu_custom_call.1} parent=11 // pred_region
          %341 = vsyncadd [#allocation17], 0
          %s342 = sshll.u32 %s6, 4
          %s343 = int_to_ptr.hbm [resolvable:$true] %s342
          %s344 = sshll.u32 [#allocation16], 4
          %s345 = int_to_ptr.vmem [resolvable:$true] %s344
          %350 = dma.hbm_to_vmem [thread:$0]  %s343, 512, %s345, [#allocation17], 128, 128, 8
        $region40: #{tpu_custom_call.1} parent=11 // pred_fallthru
          _
        // Predicated region
        $region41: #{tpu_custom_call.1} parent=11 // pred_check
          %p351 = pneg %p206
        $region42: #{tpu_custom_call.1} parent=11 // pred_check_branch
          %353 = sbr.rel (%p351) target = $region44
        $region43: #{tpu_custom_call.1} parent=11 // pred_region
          _
        $region44: #{tpu_custom_call.1} parent=11 // pred_fallthru
          _
        // Predicated region
        $region45: #{tpu_custom_call.1} parent=11 // pred_check
          %p354 = pneg %p227
        $region46: #{tpu_custom_call.1} parent=11 // pred_check_branch
          %356 = sbr.rel (%p354) target = $region48
        $region47: #{tpu_custom_call.1} parent=11 // pred_region
          %358 = vsyncadd [#allocation9], 0
          %s360 = sshll.u32 %s8, 4
          %s361 = int_to_ptr.vmem [resolvable:$true] %s360
          %363 = dma.vmem_to_smem %s361, 16, [#allocation18], [#allocation9]
        $region48: #{tpu_custom_call.1} parent=11 // pred_fallthru
          _
      $region12: #{tpu_custom_call.1} parent=5 // pred_fallthru
        _
      %p364 = scmp.lt.s32.totalorder %s21, 2
      // Predicated region
      $region49: #{tpu_custom_call.1} parent=5 // pred_check
        %p365 = pneg %p364
      $region50: #{tpu_custom_call.1} parent=5 // pred_check_branch
        %367 = sbr.rel (%p365) target = $region52
      $region51: #{tpu_custom_call.1} parent=5 // pred_region
        _
      $region52: #{tpu_custom_call.1} parent=5 // pred_fallthru
        _
      %p368 = scmp.le.s32.totalorder 1, %s21
      %p369 = scmp.lt.s32.totalorder %s21, 3
      %p370 = pnand %p368, %p369
      %p371 = pneg %p370
      // Predicated region
      $region53: #{tpu_custom_call.1} parent=5 // pred_check
        _
      $region54: #{tpu_custom_call.1} parent=5 // pred_check_branch
        %373 = sbr.rel (%p370) target = $region56
      $region55: #{tpu_custom_call.1} parent=5 // pred_region
        %s374 = ssub.s32 %s21, 1
        // Predicated region
        $region57: #{tpu_custom_call.1} parent=55 // pred_check
          %p375 = pneg %p54
        $region58: #{tpu_custom_call.1} parent=55 // pred_check_branch
          %377 = sbr.rel (%p375) target = $region60
        $region59: #{tpu_custom_call.1} parent=55 // pred_region
          %379 = dma.done [#allocation7], 256
        $region60: #{tpu_custom_call.1} parent=55 // pred_fallthru
          _
        // Predicated region
        $region61: #{tpu_custom_call.1} parent=55 // pred_check
          %p380 = pneg %p75
        $region62: #{tpu_custom_call.1} parent=55 // pred_check_branch
          %382 = sbr.rel (%p380) target = $region64
        $region63: #{tpu_custom_call.1} parent=55 // pred_region
          %384 = dma.done [#allocation11], 256
        $region64: #{tpu_custom_call.1} parent=55 // pred_fallthru
          _
        // Predicated region
        $region65: #{tpu_custom_call.1} parent=55 // pred_check
          %p385 = pneg %p96
        $region66: #{tpu_custom_call.1} parent=55 // pred_check_branch
          %387 = sbr.rel (%p385) target = $region68
        $region67: #{tpu_custom_call.1} parent=55 // pred_region
          %389 = dma.done [#allocation11], 16
        $region68: #{tpu_custom_call.1} parent=55 // pred_fallthru
          _
        // Predicated region
        $region69: #{tpu_custom_call.1} parent=55 // pred_check
          %p390 = pneg %p138
        $region70: #{tpu_custom_call.1} parent=55 // pred_check_branch
          %392 = sbr.rel (%p390) target = $region72
        $region71: #{tpu_custom_call.1} parent=55 // pred_region
          %394 = dma.done [#allocation14], 256
        $region72: #{tpu_custom_call.1} parent=55 // pred_fallthru
          _
        // Predicated region
        $region73: #{tpu_custom_call.1} parent=55 // pred_check
          %p395 = pneg %p164
        $region74: #{tpu_custom_call.1} parent=55 // pred_check_branch
          %397 = sbr.rel (%p395) target = $region76
        $region75: #{tpu_custom_call.1} parent=55 // pred_region
          %399 = dma.done [#allocation14], 256
        $region76: #{tpu_custom_call.1} parent=55 // pred_fallthru
          _
        // Predicated region
        $region77: #{tpu_custom_call.1} parent=55 // pred_check
          %p400 = pneg %p185
        $region78: #{tpu_custom_call.1} parent=55 // pred_check_branch
          %402 = sbr.rel (%p400) target = $region80
        $region79: #{tpu_custom_call.1} parent=55 // pred_region
          %404 = dma.done [#allocation17], 512
        $region80: #{tpu_custom_call.1} parent=55 // pred_fallthru
          _
        // Predicated region
        $region81: #{tpu_custom_call.1} parent=55 // pred_check
          %p405 = pneg %p227
        $region82: #{tpu_custom_call.1} parent=55 // pred_check_branch
          %407 = sbr.rel (%p405) target = $region84
        $region83: #{tpu_custom_call.1} parent=55 // pred_region
          %409 = dma.done [#allocation9], 16
        $region84: #{tpu_custom_call.1} parent=55 // pred_fallthru
          _
        %410 = sfence
        %p411 = pneg %p54
        %p412 = pneg %p51
        %p413 = pneg %p75
        %p414 = pneg %p72
        %p415 = pneg %p96
        %p416 = pneg %p93
        %p417 = pneg %p117
        %p418 = pneg %p114
        %p419 = pneg %p138
        %p420 = pneg %p135
        %p421 = pneg %p164
        %p422 = pneg %p161
        %p423 = pneg %p185
        %p424 = pneg %p182
        %p425 = pneg %p206
        %p426 = pneg %p203
        %p427 = pneg %p227
        %p428 = pneg %p224
        %p429 = pneg %p248
        %p430 = pneg %p245
        %s431 = smul.u32 2, %s31
        %p433 = scmp.eq.s32.totalorder %s30, 0
        %p434 = scmp.eq.s32.totalorder %s31, 0
        %p435 = pnand %p433, %p434
        %p436 = pneg %p435
        // Predicated region
        $region85: #{tpu_custom_call.1} parent=55 // pred_check
          _
        $region86: #{tpu_custom_call.1} parent=55 // pred_check_branch
          %438 = sbr.rel (%p435) target = $region88
        $region87: #{tpu_custom_call.1} parent=55 // pred_region
          %v439 = vld [vmem:[#allocation6] sm:$0xff]
          %v440 = vld [vmem:[#allocation6 + $0x8] sm:$0xff]
          %v441 = vld [vmem:[#allocation10] sm:$0xff]
          %v442 = vld [vmem:[#allocation10 + $0x8] sm:$0xff]
          %v443 = vld [vmem:[#allocation12] sm:$0x1]
          %v445 = vperm.slane %v443, 0
          %vm447 = vcmask 130048
          %v449 = vsel %vm447, %v439, 0
          %v452 = vsel %vm447, %v440, 0
          %454 = vmatpush.msra.mxu0 0.0
          %455 = vmatpush.msra.mxu0 0.0
          %456 = vmatpush.msra.mxu0 0.0
          %457 = vmatpush.msra.mxu0 0.0
          %458 = vmatpush.msra.mxu0 0.0
          %459 = vmatpush.msra.mxu0 0.0
          %460 = vmatpush.msra.mxu0 0.0
          %461 = vmatpush.msra.mxu0 0.0
          %462 = vmatpush.msra.mxu0 0.0
          %463 = vmatpush.msra.mxu0 0.0
          %464 = vmatpush.msra.mxu0 0.0
          %465 = vmatpush.msra.mxu0 0.0
          %466 = vmatpush.msra.mxu0 0.0
          %467 = vmatpush.msra.mxu0 0.0
          %468 = vmatpush.msra.mxu0 %v442
          %469 = vmatpush.msra.mxu0 %v441
          %470 = vmatmul.f32.gmra.mxu0 %v449
          %v471 = vpop.f32.mrf.mxu0
          %v472 = vadd.f32 %v445, %v471
          %473 = vmatmul.f32.gmra.mxu0 %v452
          %v474 = vpop.f32.mrf.mxu0
          %v475 = vadd.f32 %v445, %v474
          %476 = vdwg.mxu0
          %v477 = vmax.f32 %v472, 0.0
          %v478 = vmax.f32 %v475, 0.0
          %vm479 = vcmask 261120
          %480 = vst.msk [vmem:[#allocation2] sm:$0xff] %vm479, %v477
          %481 = vst.msk [vmem:[#allocation2 + $0x8] sm:$0xff] %vm479, %v478
          %482 = vst.msk [vmem:[#allocation4] sm:$0xff] %vm479, %v477
          %483 = vst.msk [vmem:[#allocation4 + $0x8] sm:$0xff] %vm479, %v478
        $region88: #{tpu_custom_call.1} parent=55 // pred_fallthru
          _
        // Predicated region
        $region89: #{tpu_custom_call.1} parent=55 // pred_check
          %p484 = pneg %p434
        $region90: #{tpu_custom_call.1} parent=55 // pred_check_branch
          %486 = sbr.rel (%p484) target = $region92
        $region91: #{tpu_custom_call.1} parent=55 // pred_region
          %s487 = smul.u32 %s30, 8
          %s488 = scalar_lea.vmem [#allocation13], %s487
          %v489 = vld [vmem:[%s488] sm:$0xff]
          %v490 = vld [vmem:[#allocation2] sm:$0xff]
          %v491 = vld [vmem:[#allocation2 + $0x8] sm:$0xff]
          %vm492 = vcmask 261120
          %v494 = vsel %vm492, %v489, 0
          %v497 = vsel %vm492, %v490, 0
          %v500 = vsel %vm492, %v491, 0
          %502 = vmatpush.xpose.msra.mxu0 0.0
          %503 = vmatpush.xpose.msra.mxu0 0.0
          %504 = vmatpush.xpose.msra.mxu0 0.0
          %505 = vmatpush.xpose.msra.mxu0 0.0
          %506 = vmatpush.xpose.msra.mxu0 0.0
          %507 = vmatpush.xpose.msra.mxu0 0.0
          %508 = vmatpush.xpose.msra.mxu0 0.0
          %509 = vmatpush.xpose.msra.mxu0 0.0
          %510 = vmatpush.xpose.msra.mxu0 0.0
          %511 = vmatpush.xpose.msra.mxu0 0.0
          %512 = vmatpush.xpose.msra.mxu0 0.0
          %513 = vmatpush.xpose.msra.mxu0 0.0
          %514 = vmatpush.xpose.msra.mxu0 0.0
          %515 = vmatpush.xpose.msra.mxu0 0.0
          %516 = vmatpush.xpose.msra.mxu0 %v500
          %517 = vmatpush.xpose.msra.mxu0 %v497
          %518 = vmatmul.f32.gmra.mxu0 %v494
          %v519 = vpop.f32.mrf.mxu0
          %v520 = vadd.f32 0.0, %v519
          %521 = vdwg.mxu0
          %vm522 = vcmask 130048
          %523 = vst.msk [vmem:[#allocation5] sm:$0xff] %vm522, %v520
        $region92: #{tpu_custom_call.1} parent=55 // pred_fallthru
          _
        %s524 = sld [smem:[#allocation18]]
        %s525 = smul.u32 %s30, 3
        %s526 = sadd.s32 %s525, 1
        %s527 = sld [smem:[#allocation18 + %s526]]
        %s528 = sadd.s32 %s525, 2
        %s529 = sld [smem:[#allocation18 + %s528]]
        %s530 = sadd.s32 %s525, 3
        %s531 = sld [smem:[#allocation18 + %s530]]
        %s532 = smul.u32 %s31, 16
        %v533 = vld [vmem:[#allocation2] sm:$0xff]
        %v534 = vld [vmem:[#allocation2 + $0x8] sm:$0xff]
        %s535 = scalar_lea.vmem [#allocation2], %s532
        %v536 = vld [vmem:[%s535] sm:$0xff]
        %v537 = vld [vmem:[%s535 + $0x8] sm:$0xff]
        %s538 = scalar_lea.vmem %s3, %s30
        %v539 = vld [vmem:[%s538] sm:$0x1]
        %v541 = vperm.slane %v539, 0
        %v543 = vmul.f32 %v536, %v541
        %v544 = vmul.f32 %v537, %v541
        %vm545 = vcmask 261120
        %v546 = vsel %vm545, %v543, 0.0
        %547 = vadd.xlane.f32.xlu0 %v546
        %v548 = vpop.xlane.xlu0 %547
        %v549 = vsel %vm545, %v544, 0.0
        %550 = vadd.xlane.f32.xlu0 %v549
        %v551 = vpop.xlane.xlu0 %550
        %v552 = vld [vmem:[#allocation5] sm:$0x1]
        %v553 = vperm.slane %v552, 0
        %v554 = vadd.f32 %v548, %v553
        %v555 = vadd.f32 %v551, %v553
        %v556 = vstv %s527
        %v557 = vadd.f32 %v554, %v556
        %v558 = vadd.f32 %v555, %v556
        %v559 = vtanh.pop %v557
        %v560 = vtanh.pop %v558
        %v561 = vld [vmem:[#allocation15] sm:$0xff]
        %v562 = vld [vmem:[#allocation15 + $0x8] sm:$0xff]
        %v563 = vand.u32 2147483647, %v561
        %v564 = vand.u32 2147483647, %v562
        %vm565 = vcmp.gt.f32.partialorder %v561, 0.0
        %vm566 = vcmp.gt.f32.partialorder %v562, 0.0
        %v567 = vstv %s529
        %v568 = vstv %s531
        %v569 = vsel %vm565, %v567, %v568
        %v570 = vsel %vm566, %v567, %v568
        %v571 = vadd.f32 %v559, %v569
        %v572 = vadd.f32 %v560, %v570
        %v573 = vmul.f32 %v571, %v563
        %v574 = vmul.f32 %v572, %v564
        %v575 = vpack.c.bf16 %v574, %v573
        %v576 = vpack.c.bf16 %v534, %v533
        %vm577 = vcmask 130048
        %v579 = vsel %vm577, %v575, 0
        %581 = vmatpush.bf16.msra.mxu0 0
        %582 = vmatpush.bf16.msra.mxu0 0
        %583 = vmatpush.bf16.msra.mxu0 0
        %584 = vmatpush.bf16.msra.mxu0 0
        %585 = vmatpush.bf16.msra.mxu0 0
        %586 = vmatpush.bf16.msra.mxu0 0
        %587 = vmatpush.bf16.msra.mxu0 0
        %588 = vmatpush.bf16.msra.mxu0 %v576
        %589 = vmatmul.bf16.gmra.mxu0 %v579
        %v590 = vpop.f32.mrf.mxu0
        %v591 = vadd.f32 0.0, %v590
        %v592 = vpop.f32.mrf.mxu0
        %v593 = vadd.f32 0.0, %v592
        %594 = vdwg.mxu0
        %s595 = scalar_lea.vmem [#allocation4], %s532
        %v596 = vld [vmem:[%s595] sm:$0xff]
        %v597 = vld [vmem:[%s595 + $0x8] sm:$0xff]
        %v598 = vstv %s524
        %v599 = vmul.f32 %v598, %v596
        %v600 = vmul.f32 %v598, %v597
        %v601 = vadd.f32 %v599, %v591
        %v602 = vadd.f32 %v600, %v593
        %s603 = scalar_lea.vmem [#allocation3], %s532
        %604 = vst.msk [vmem:[%s603] sm:$0xff] %vm545, %v601
        %605 = vst.msk [vmem:[%s603 + $0x8] sm:$0xff] %vm545, %v602
        // Predicated region
        $region93: #{tpu_custom_call.1} parent=55 // pred_check
          %p606 = pneg %p434
        $region94: #{tpu_custom_call.1} parent=55 // pred_check_branch
          %608 = sbr.rel (%p606) target = $region96
        $region95: #{tpu_custom_call.1} parent=55 // pred_region
          %v609 = vld [vmem:[#allocation3] sm:$0xff]
          %v610 = vld [vmem:[#allocation3 + $0x8] sm:$0xff]
          %611 = vst.msk [vmem:[#allocation2] sm:$0xff] %vm545, %v609
          %612 = vst.msk [vmem:[#allocation2 + $0x8] sm:$0xff] %vm545, %v610
        $region96: #{tpu_custom_call.1} parent=55 // pred_fallthru
          _
        %p613 = scmp.eq.s32.totalorder %s30, 1
        %p614 = pnand %p613, %p434
        %p615 = pneg %p614
        // Predicated region
        $region97: #{tpu_custom_call.1} parent=55 // pred_check
          _
        $region98: #{tpu_custom_call.1} parent=55 // pred_check_branch
          %617 = sbr.rel (%p614) target = $region100
        $region99: #{tpu_custom_call.1} parent=55 // pred_region
          %v618 = vld [vmem:[#allocation3] sm:$0xff]
          %v619 = vld [vmem:[#allocation3 + $0x8] sm:$0xff]
          %v620 = vld [vmem:[#allocation16] sm:$0xff]
          %v621 = vld [vmem:[#allocation16 + $0x8] sm:$0xff]
          %v622 = vld [vmem:[#allocation16 + $0x10] sm:$0xff]
          %v623 = vld [vmem:[#allocation16 + $0x18] sm:$0xff]
          %v624 = vld [vmem:[%s7] sm:$0x1]
          %v626 = vperm.slane %v624, 0
          %v629 = vsel %vm545, %v618, 0
          %v632 = vsel %vm545, %v619, 0
          %634 = vmatpush.msra.mxu0 0.0
          %635 = vmatpush.msra.mxu0 0.0
          %636 = vmatpush.msra.mxu0 0.0
          %637 = vmatpush.msra.mxu0 0.0
          %638 = vmatpush.msra.mxu0 0.0
          %639 = vmatpush.msra.mxu0 0.0
          %640 = vmatpush.msra.mxu0 0.0
          %641 = vmatpush.msra.mxu0 0.0
          %642 = vmatpush.msra.mxu0 0.0
          %643 = vmatpush.msra.mxu0 0.0
          %644 = vmatpush.msra.mxu0 0.0
          %645 = vmatpush.msra.mxu0 0.0
          %646 = vmatpush.msra.mxu0 %v623
          %647 = vmatpush.msra.mxu0 %v622
          %648 = vmatpush.msra.mxu0 %v621
          %649 = vmatpush.msra.mxu0 %v620
          %650 = vmatmul.f32.gmra.mxu0 %v629
          %v651 = vpop.f32.mrf.mxu0
          %v652 = vadd.f32 %v626, %v651
          %653 = vmatmul.f32.gmra.mxu0 %v632
          %v654 = vpop.f32.mrf.mxu0
          %v655 = vadd.f32 %v626, %v654
          %656 = vdwg.mxu0
          %657 = vmax.xlane.f32.xlu0 %v652
          %v658 = vpop.xlane.xlu0 %657
          %659 = vmax.xlane.f32.xlu0 %v655
          %v660 = vpop.xlane.xlu0 %659
          %v661 = vsub.f32 %v652, %v658
          %v662 = vsub.f32 %v655, %v660
          %v663 = vmul.f32 %v661, 1.442695
          %v664 = vpow.pop %v663
          %v665 = vmul.f32 %v662, 1.442695
          %v666 = vpow.pop %v665
          %667 = vadd.xlane.f32.xlu0 %v664
          %v668 = vpop.xlane.xlu0 %667
          %669 = vadd.xlane.f32.xlu0 %v666
          %v670 = vpop.xlane.xlu0 %669
          %v671 = vlog2.pop %v668
          %v672 = vmul.f32 %v671, 0.6931472
          %v673 = vlog2.pop %v670
          %v674 = vmul.f32 %v673, 0.6931472
          %v675 = vsub.f32 %v661, %v672
          %v676 = vsub.f32 %v662, %v674
          %677 = vst [vmem:[#allocation19] sm:$0xff] %v675
          %678 = vst [vmem:[#allocation19 + $0x8] sm:$0xff] %v676
        $region100: #{tpu_custom_call.1} parent=55 // pred_fallthru
          _
        // Predicated region
        $region101: #{tpu_custom_call.1} parent=55 // pred_check
          %p679 = pneg %p245
        $region102: #{tpu_custom_call.1} parent=55 // pred_check_branch
          %681 = sbr.rel (%p679) target = $region104
        $region103: #{tpu_custom_call.1} parent=55 // pred_region
          %683 = vsyncadd [#allocation8], 0
          %s684 = sshll.u32 [#allocation19], 4
          %s685 = int_to_ptr.vmem [resolvable:$true] %s684
          %s686 = sshll.u32 %s9, 4
          %s687 = int_to_ptr.hbm [resolvable:$true] %s686
          %692 = dma.vmem_to_hbm [thread:$0]  %s685, 256, %s687, [#allocation8], 128, 128, 8
        $region104: #{tpu_custom_call.1} parent=55 // pred_fallthru
          _
        // Predicated region
        $region105: #{tpu_custom_call.1} parent=55 // pred_check
          %p693 = pneg %p245
        $region106: #{tpu_custom_call.1} parent=55 // pred_check_branch
          %695 = sbr.rel (%p693) target = $region108
        $region107: #{tpu_custom_call.1} parent=55 // pred_region
          %697 = dma.done [#allocation8], 256
        $region108: #{tpu_custom_call.1} parent=55 // pred_fallthru
          _
      $region56: #{tpu_custom_call.1} parent=5 // pred_fallthru
        _
      %p698 = scmp.le.s32.totalorder 2, %s21
      // Predicated region
      $region109: #{tpu_custom_call.1} parent=5 // pred_check
        %p699 = pneg %p698
      $region110: #{tpu_custom_call.1} parent=5 // pred_check_branch
        %701 = sbr.rel (%p699) target = $region112
      $region111: #{tpu_custom_call.1} parent=5 // pred_region
        %s702 = ssub.s32 %s21, 2
      $region112: #{tpu_custom_call.1} parent=5 // pred_fallthru
        _
    $region6: #{tpu_custom_call.1} parent=1 // loop_footer
      %s25 = sadd.s32 1, %s21
    $region7: #{tpu_custom_call.1} parent=1 // loop_footer_branch
      %20 = sbr.rel target = $region3
    $region8: #{tpu_custom_call.1} parent=1 // loop_exit
      _
    %703 = vsyncpa [#allocation7], 1
    %s704 = scalar_lea.sflag [#allocation7], 1
    %705 = vsyncpa %s704, 1
    %706 = vsyncpa [#allocation11], 1
    %707 = vsyncpa [#allocation14], 1
    %708 = vsyncpa [#allocation17], 1
    %709 = vsyncpa [#allocation8], 1
    %s710 = scalar_lea.sflag [#allocation8], 1
    %711 = vsyncpa %s710, 1
    %712 = vsyncpa [#allocation9], 1
    %s713 = scalar_lea.sflag [#allocation9], 1
    %714 = vsyncpa %s713, 1

</llo_original>
